<compile_context>
chip_gen: v7x
topology: tpu7x:2x2x1
jax: 0.10.0
libtpu: 0.0.40
codegen_flags: <defaults>
</compile_context>

<pallas_src>
import jax
import jax.numpy as jnp
from jax.experimental import pallas as pl
from jax.experimental.pallas import tpu as pltpu
import numpy as np

HIDDEN = 128
F_IN = 4
N_HEADS = 3          # mu | sigma2 | value
W1_ROWS = 8          # rows 0-3 = w1, row 4 = b1, rows 5-7 = 0
HEAD_ROWS = 4        # rows 0-2 = head weights, row 3 lanes 0-2 = head biases


def _policy_kernel(env_ref, x_ref, w1b_ref, head_ref, out_ref):
    # env_ref is the scalar-prefetch ref (used only by the index_maps).
    del env_ref

    x = x_ref[0]                        # [B, 4]
    w1b = w1b_ref[...]                  # [8, 128]   rows 0-3 = w1, row 4 = b1
    wh = head_ref[0]                    # [4, 128]   selected env's head tile
    B = x.shape[0]

    # ---- Layer 1 on the VPU: bias row + 4 broadcast FMAs, then ReLU. ----
    # (K=4 is far too small to be worth an MXU fill/drain.)
    h = jnp.broadcast_to(w1b[F_IN:F_IN + 1, :], (B, HIDDEN))   # bias row b1
    for k in range(F_IN):                                      # static unroll
        h = h + x[:, k:k + 1] * w1b[k:k + 1, :]
    h = jnp.maximum(h, 0.0)                                    # [B, 128]

    # ---- Heads on VPU + XLU: lane-dense weights => vreg mul + lane reduce.
    z_mu = jnp.sum(h * wh[0:1, :], axis=-1, keepdims=True)     # [B, 1]
    z_sig = jnp.sum(h * wh[1:2, :], axis=-1, keepdims=True)    # [B, 1]
    z_val = jnp.sum(h * wh[2:3, :], axis=-1, keepdims=True)    # [B, 1]

    # Assemble [B, 3] (columns = mu | sigma2 | value) and add the bias row.
    col = jax.lax.broadcasted_iota(jnp.int32, (B, N_HEADS), 1)
    z = jnp.where(col == 0, z_mu, jnp.where(col == 1, z_sig, z_val))
    z = z + wh[3:4, 0:N_HEADS]                                 # [1, 3] biases

    # Numerically-stable softplus, selected only for the sigma2 column.
    sp = jnp.maximum(z, 0.0) + jnp.log1p(jnp.exp(-jnp.abs(z)))
    out_ref[0] = jnp.where(col == 1, sp, z)                    # [B, 3]


def policy_forward_batched(x, params, env_idx):
    """x: [S, B, 4] float32.  env_idx: [S] int32.  Returns (mu, sigma, value),
    each [S, B, 1].  One pallas_call amortizes launch/DMA overhead over S steps."""
    S, B, _ = x.shape
    w1b = params["w1b"]                          # [8, 128]
    head = params["head"]                        # [num_envs, 4, 128]
    num_envs = head.shape[0]

    # Clamp so an out-of-range index can never produce an OOB head DMA.
    env = jnp.clip(jnp.asarray(env_idx, jnp.int32).reshape(S), 0, num_envs - 1)

    grid_spec = pltpu.PrefetchScalarGridSpec(
        num_scalar_prefetch=1,
        grid=(S,),
        in_specs=[
            pl.BlockSpec((1, B, F_IN), lambda i, env: (i, 0, 0)),
            pl.BlockSpec((W1_ROWS, HIDDEN), lambda i, env: (0, 0)),
            # Only the selected env's (8,128)-padded head tile is DMA'd.
            pl.BlockSpec((1, HEAD_ROWS, HIDDEN), lambda i, env: (env[i], 0, 0)),
        ],
        out_specs=pl.BlockSpec((1, B, N_HEADS), lambda i, env: (i, 0, 0)),
    )

    # Bytes reflect padded (8,128) f32 tiles actually moved by the DMAs.
    tile_bytes = 4 * 8 * HIDDEN                  # 4 KiB per padded tile
    cost = pl.CostEstimate(
        flops=S * (2 * B * F_IN * HIDDEN + 2 * B * HIDDEN * N_HEADS),
        transcendentals=S * 2 * B * N_HEADS,
        bytes_accessed=S * 3 * tile_bytes + tile_bytes,   # x + head + out per step, w1b once
    )

    out = pl.pallas_call(
        _policy_kernel,
        out_shape=jax.ShapeDtypeStruct((S, B, N_HEADS), jnp.float32),
        grid_spec=grid_spec,
        compiler_params=pltpu.CompilerParams(
            dimension_semantics=("parallel",)),   # megacore sharding on v7x
        cost_estimate=cost,
    )(env, x, w1b, head)

    mu = out[..., 0:1]
    sigma = out[..., 1:2]
    value = out[..., 2:3]
    return mu, sigma, value


def policy_forward(x, params, env_idx):
    """Single-step convenience wrapper matching Policy.forward(x, env_idx):
    x: [B, 4] -> (mu, sigma, value), each [B, 1]."""
    env = jnp.asarray(env_idx, jnp.int32).reshape(1)
    mu, sigma, value = policy_forward_batched(x[None], params, env)
    return mu[0], sigma[0], value[0]


def normalized_columns_initializer(key, shape, std=1.0):
    """Matches the PyTorch helper: randn normalized per-row by sqrt(sum(row^2))."""
    out = jax.random.normal(key, shape, dtype=jnp.float32)
    norm = jnp.sqrt(jnp.sum(out * out, axis=1, keepdims=True))
    return out * (std / norm)


def init_policy_params(key, num_envs):
    k1, k2, k3, k4 = jax.random.split(key, 4)

    # affine1: Linear(4, 128) with uniform(-w_bound, w_bound), bias = 0,
    # fused into one [8, 128] tile (rows 0-3 = w1, row 4 = b1).
    w_bound = float(np.sqrt(6.0 / (F_IN + HIDDEN)))
    w1 = jax.random.uniform(k1, (F_IN, HIDDEN), jnp.float32,
                            minval=-w_bound, maxval=w_bound)
    b1 = jnp.zeros((HIDDEN,), jnp.float32)
    w1b = jnp.zeros((W1_ROWS, HIDDEN), jnp.float32)
    w1b = w1b.at[:F_IN].set(w1).at[F_IN].set(b1)

    # Per-env heads, lane-dense: [num_envs, 4, 128]
    #   row 0: mu weights     (normalized-columns init, std=0.01)
    #   row 1: sigma2 weights (keeps the Linear uniform init)
    #   row 2: value weights  (normalized-columns init, std=1.0)
    #   row 3: lanes 0-2 = biases (all 0, as in the PyTorch module)
    hb = float(np.sqrt(6.0 / (HIDDEN + 1)))
    head = np.zeros((num_envs, HEAD_ROWS, HIDDEN), np.float32)
    for e in range(num_envs):
        mu_w = normalized_columns_initializer(jax.random.fold_in(k2, e), (1, HIDDEN), 0.01)
        val_w = normalized_columns_initializer(jax.random.fold_in(k3, e), (1, HIDDEN), 1.0)
        sig_w = jax.random.uniform(jax.random.fold_in(k4, e), (1, HIDDEN), jnp.float32,
                                   minval=-hb, maxval=hb)
        head[e, 0] = np.asarray(mu_w[0])
        head[e, 1] = np.asarray(sig_w[0])
        head[e, 2] = np.asarray(val_w[0])
        # head[e, 3, 0:3] stays 0 (biases)

    return {"w1b": w1b, "head": jnp.asarray(head)}


if __name__ == "__main__":
    num_envs = 3     # original script has num_envs = 0; pick a small positive value
    num_steps = 4    # batch several RL steps into one pallas_call
    batch = 8

    key = jax.random.PRNGKey(0)
    k_param, k_x = jax.random.split(key)
    params = init_policy_params(k_param, num_envs)
    x = jax.random.normal(k_x, (num_steps, batch, F_IN), dtype=jnp.float32)
    env_idx = jnp.array([1, 0, 2, 1], dtype=jnp.int32)

    mu, sigma, value = policy_forward_batched(x, params, env_idx)
    jax.block_until_ready((mu, sigma, value))
    assert mu.shape == (num_steps, batch, 1)
    assert sigma.shape == (num_steps, batch, 1)
    assert value.shape == (num_steps, batch, 1)

    # Reference check in plain JAX (same math as the PyTorch forward).
    w1 = params["w1b"][:F_IN]          # [4, 128]
    b1 = params["w1b"][F_IN]           # [128]
    hp = jax.lax.Precision.HIGHEST
    for s in range(num_steps):
        e = int(env_idx[s])
        h = jnp.maximum(jnp.dot(x[s], w1, precision=hp) + b1, 0.0)
        wh = params["head"][e]
        bias = wh[3, :N_HEADS]
        mu_ref = jnp.dot(h, wh[0], precision=hp) + bias[0]
        sig_ref = jax.nn.softplus(jnp.dot(h, wh[1], precision=hp) + bias[1])
        val_ref = jnp.dot(h, wh[2], precision=hp) + bias[2]
        np.testing.assert_allclose(np.asarray(mu[s, :, 0]), np.asarray(mu_ref),
                                   rtol=1e-5, atol=1e-5)
        np.testing.assert_allclose(np.asarray(sigma[s, :, 0]), np.asarray(sig_ref),
                                   rtol=1e-5, atol=1e-5)
        np.testing.assert_allclose(np.asarray(value[s, :, 0]), np.asarray(val_ref),
                                   rtol=1e-5, atol=1e-5)

    # Also exercise the single-step wrapper (module-parity API).
    mu1, sig1, val1 = policy_forward(x[2], params, 2)
    jax.block_until_ready((mu1, sig1, val1))
    h2 = jnp.maximum(jnp.dot(x[2], w1, precision=hp) + b1, 0.0)
    mu1_ref = jnp.dot(h2, params["head"][2][0], precision=hp) + params["head"][2][3, 0]
    np.testing.assert_allclose(np.asarray(mu1[:, 0]), np.asarray(mu1_ref),
                               rtol=1e-5, atol=1e-5)

    print("KERNEL_OK")
</pallas_src>

<mosaic_0001>
module attributes {stable_mosaic.version = 11 : i64} {
  func.func @_policy_kernel(%arg0: i32, %arg1: memref<4xi32, #tpu.memory_space<smem>>, %arg2: memref<1x8x4xf32, #tpu.memory_space<vmem>>, %arg3: memref<8x128xf32, #tpu.memory_space<vmem>>, %arg4: memref<1x4x128xf32, #tpu.memory_space<vmem>>, %arg5: memref<1x8x3xf32, #tpu.memory_space<vmem>>) attributes {dimension_semantics = [#tpu.dimension_semantics<parallel>], iteration_bounds = array<i64: 4>, scalar_prefetch = 1 : i64, scratch_operands = 0 : i64, tpu.core_type = #tpu.core_type<tc>, window_params = [{transform_indices = @transform_0, window_bounds = array<i64: 1, 8, 4>}, {pipeline_mode = #tpu.pipeline_mode<synchronous>, transform_indices = @transform_1, window_bounds = array<i64: 8, 128>}, {transform_indices = @transform_2, window_bounds = array<i64: 1, 4, 128>}, {transform_indices = @transform_3, window_bounds = array<i64: 1, 8, 3>}]} {
    %c0 = arith.constant 0 : index
    %c0_0 = arith.constant 0 : index
    %c0_1 = arith.constant 0 : index
    %0 = vector.load %arg2[%c0, %c0_0, %c0_1] : memref<1x8x4xf32, #tpu.memory_space<vmem>>, vector<1x8x4xf32>
    %1 = vector.shape_cast %0 : vector<1x8x4xf32> to vector<8x4xf32>
    %c0_2 = arith.constant 0 : index
    %c0_3 = arith.constant 0 : index
    %2 = vector.load %arg3[%c0_2, %c0_3] : memref<8x128xf32, #tpu.memory_space<vmem>>, vector<8x128xf32>
    %c0_4 = arith.constant 0 : index
    %c0_5 = arith.constant 0 : index
    %c0_6 = arith.constant 0 : index
    %3 = vector.load %arg4[%c0_4, %c0_5, %c0_6] : memref<1x4x128xf32, #tpu.memory_space<vmem>>, vector<1x4x128xf32>
    %4 = vector.shape_cast %3 : vector<1x4x128xf32> to vector<4x128xf32>
    %5 = vector.extract_strided_slice %2 {offsets = [4, 0], sizes = [1, 128], strides = [1, 1]} : vector<8x128xf32> to vector<1x128xf32>
    %6 = vector.shape_cast %5 : vector<1x128xf32> to vector<1x128xf32>
    %7 = vector.broadcast %6 : vector<1x128xf32> to vector<8x128xf32>
    %8 = vector.extract_strided_slice %1 {offsets = [0, 0], sizes = [8, 1], strides = [1, 1]} : vector<8x4xf32> to vector<8x1xf32>
    %9 = vector.extract_strided_slice %2 {offsets = [0, 0], sizes = [1, 128], strides = [1, 1]} : vector<8x128xf32> to vector<1x128xf32>
    %10 = vector.broadcast %8 : vector<8x1xf32> to vector<8x128xf32>
    %11 = vector.broadcast %9 : vector<1x128xf32> to vector<8x128xf32>
    %12 = arith.mulf %10, %11 : vector<8x128xf32>
    %13 = arith.addf %7, %12 : vector<8x128xf32>
    %14 = vector.extract_strided_slice %1 {offsets = [0, 1], sizes = [8, 1], strides = [1, 1]} : vector<8x4xf32> to vector<8x1xf32>
    %15 = vector.extract_strided_slice %2 {offsets = [1, 0], sizes = [1, 128], strides = [1, 1]} : vector<8x128xf32> to vector<1x128xf32>
    %16 = vector.broadcast %14 : vector<8x1xf32> to vector<8x128xf32>
    %17 = vector.broadcast %15 : vector<1x128xf32> to vector<8x128xf32>
    %18 = arith.mulf %16, %17 : vector<8x128xf32>
    %19 = arith.addf %13, %18 : vector<8x128xf32>
    %20 = vector.extract_strided_slice %1 {offsets = [0, 2], sizes = [8, 1], strides = [1, 1]} : vector<8x4xf32> to vector<8x1xf32>
    %21 = vector.extract_strided_slice %2 {offsets = [2, 0], sizes = [1, 128], strides = [1, 1]} : vector<8x128xf32> to vector<1x128xf32>
    %22 = vector.broadcast %20 : vector<8x1xf32> to vector<8x128xf32>
    %23 = vector.broadcast %21 : vector<1x128xf32> to vector<8x128xf32>
    %24 = arith.mulf %22, %23 : vector<8x128xf32>
    %25 = arith.addf %19, %24 : vector<8x128xf32>
    %26 = vector.extract_strided_slice %1 {offsets = [0, 3], sizes = [8, 1], strides = [1, 1]} : vector<8x4xf32> to vector<8x1xf32>
    %27 = vector.extract_strided_slice %2 {offsets = [3, 0], sizes = [1, 128], strides = [1, 1]} : vector<8x128xf32> to vector<1x128xf32>
    %28 = vector.broadcast %26 : vector<8x1xf32> to vector<8x128xf32>
    %29 = vector.broadcast %27 : vector<1x128xf32> to vector<8x128xf32>
    %30 = arith.mulf %28, %29 : vector<8x128xf32>
    %31 = arith.addf %25, %30 : vector<8x128xf32>
    %cst = arith.constant 0.000000e+00 : f32
    %32 = vector.broadcast %cst : f32 to vector<8x128xf32>
    %33 = arith.maximumf %31, %32 : vector<8x128xf32>
    %34 = vector.extract_strided_slice %4 {offsets = [0, 0], sizes = [1, 128], strides = [1, 1]} : vector<4x128xf32> to vector<1x128xf32>
    %35 = vector.broadcast %34 : vector<1x128xf32> to vector<8x128xf32>
    %36 = arith.mulf %33, %35 : vector<8x128xf32>
    %cst_7 = arith.constant dense<0.000000e+00> : vector<8xf32>
    %37 = vector.multi_reduction <add>, %36, %cst_7 [1] : vector<8x128xf32> to vector<8xf32>
    %38 = vector.shape_cast %37 : vector<8xf32> to vector<8x1xf32>
    %39 = vector.extract_strided_slice %4 {offsets = [1, 0], sizes = [1, 128], strides = [1, 1]} : vector<4x128xf32> to vector<1x128xf32>
    %40 = vector.broadcast %39 : vector<1x128xf32> to vector<8x128xf32>
    %41 = arith.mulf %33, %40 : vector<8x128xf32>
    %cst_8 = arith.constant dense<0.000000e+00> : vector<8xf32>
    %42 = vector.multi_reduction <add>, %41, %cst_8 [1] : vector<8x128xf32> to vector<8xf32>
    %43 = vector.shape_cast %42 : vector<8xf32> to vector<8x1xf32>
    %44 = vector.extract_strided_slice %4 {offsets = [2, 0], sizes = [1, 128], strides = [1, 1]} : vector<4x128xf32> to vector<1x128xf32>
    %45 = vector.broadcast %44 : vector<1x128xf32> to vector<8x128xf32>
    %46 = arith.mulf %33, %45 : vector<8x128xf32>
    %cst_9 = arith.constant dense<0.000000e+00> : vector<8xf32>
    %47 = vector.multi_reduction <add>, %46, %cst_9 [1] : vector<8x128xf32> to vector<8xf32>
    %48 = vector.shape_cast %47 : vector<8xf32> to vector<8x1xf32>
    %49 = tpu.iota {dimensions = array<i32: 1>} : vector<8x3xi32>
    %c0_i32 = arith.constant 0 : i32
    %50 = vector.broadcast %c0_i32 : i32 to vector<8x3xi32>
    %51 = arith.cmpi eq, %49, %50 : vector<8x3xi32>
    %c1_i32 = arith.constant 1 : i32
    %52 = vector.broadcast %c1_i32 : i32 to vector<8x3xi32>
    %53 = arith.cmpi eq, %49, %52 : vector<8x3xi32>
    %54 = vector.shape_cast %43 : vector<8x1xf32> to vector<8x1xf32>
    %55 = vector.broadcast %54 : vector<8x1xf32> to vector<8x3xf32>
    %56 = vector.shape_cast %48 : vector<8x1xf32> to vector<8x1xf32>
    %57 = vector.broadcast %56 : vector<8x1xf32> to vector<8x3xf32>
    %58 = arith.select %53, %55, %57 : vector<8x3xi1>, vector<8x3xf32>
    %59 = vector.shape_cast %38 : vector<8x1xf32> to vector<8x1xf32>
    %60 = vector.broadcast %59 : vector<8x1xf32> to vector<8x3xf32>
    %61 = arith.select %51, %60, %58 : vector<8x3xi1>, vector<8x3xf32>
    %62 = vector.extract_strided_slice %4 {offsets = [3, 0], sizes = [1, 3], strides = [1, 1]} : vector<4x128xf32> to vector<1x3xf32>
    %63 = vector.broadcast %62 : vector<1x3xf32> to vector<8x3xf32>
    %64 = arith.addf %61, %63 : vector<8x3xf32>
    %cst_10 = arith.constant 0.000000e+00 : f32
    %65 = vector.broadcast %cst_10 : f32 to vector<8x3xf32>
    %66 = arith.maximumf %64, %65 : vector<8x3xf32>
    %67 = math.absf %64 : vector<8x3xf32>
    %cst_11 = arith.constant 0.000000e+00 : f32
    %68 = vector.broadcast %cst_11 : f32 to vector<8x3xf32>
    %69 = arith.subf %68, %67 : vector<8x3xf32>
    %70 = math.exp %69 : vector<8x3xf32>
    %71 = math.log1p %70 : vector<8x3xf32>
    %72 = arith.addf %66, %71 : vector<8x3xf32>
    %c1_i32_12 = arith.constant 1 : i32
    %73 = vector.broadcast %c1_i32_12 : i32 to vector<8x3xi32>
    %74 = arith.cmpi eq, %49, %73 : vector<8x3xi32>
    %75 = arith.select %74, %72, %64 : vector<8x3xi1>, vector<8x3xf32>
    %c0_13 = arith.constant 0 : index
    %c0_14 = arith.constant 0 : index
    %c0_15 = arith.constant 0 : index
    %76 = vector.load %arg5[%c0_13, %c0_14, %c0_15] : memref<1x8x3xf32, #tpu.memory_space<vmem>>, vector<1x8x3xf32>
    %77 = vector.shape_cast %76 : vector<1x8x3xf32> to vector<8x3xf32>
    %78 = vector.shape_cast %75 : vector<8x3xf32> to vector<1x8x3xf32>
    tpu.vector_store %arg5[%c0_13, %c0_14, %c0_15], %78 {strides = array<i32>} : memref<1x8x3xf32, #tpu.memory_space<vmem>>, vector<1x8x3xf32>,
    return
  }
  func.func @transform_0(%arg0: i32, %arg1: memref<4xi32, #tpu.memory_space<smem>>) -> (i32, i32, i32) {
    %c0_i32 = arith.constant 0 : i32
    %c0_i32_0 = arith.constant 0 : i32
    %c0_i32_1 = arith.constant 0 : i32
    return %arg0, %c0_i32, %c0_i32_0 : i32, i32, i32
  }
  func.func @transform_1(%arg0: i32, %arg1: memref<4xi32, #tpu.memory_space<smem>>) -> (i32, i32) {
    %c0_i32 = arith.constant 0 : i32
    %c0_i32_0 = arith.constant 0 : i32
    %c0_i32_1 = arith.constant 0 : i32
    return %c0_i32, %c0_i32_0 : i32, i32
  }
  func.func @transform_2(%arg0: i32, %arg1: memref<4xi32, #tpu.memory_space<smem>>) -> (i32, i32, i32) {
    %0 = arith.index_cast %arg0 : i32 to index
    %1 = memref.load %arg1[%0] : memref<4xi32, #tpu.memory_space<smem>>
    %c0_i32 = arith.constant 0 : i32
    %c0_i32_0 = arith.constant 0 : i32
    %c0_i32_1 = arith.constant 0 : i32
    return %1, %c0_i32, %c0_i32_0 : i32, i32, i32
  }
  func.func @transform_3(%arg0: i32, %arg1: memref<4xi32, #tpu.memory_space<smem>>) -> (i32, i32, i32) {
    %c0_i32 = arith.constant 0 : i32
    %c0_i32_0 = arith.constant 0 : i32
    %c0_i32_1 = arith.constant 0 : i32
    return %arg0, %c0_i32, %c0_i32_0 : i32, i32, i32
  }
}

</mosaic_0001>

<llo_original>
// kernel: tpu_custom_call.1
$region0: #{tpu_custom_call.1}
  #allocation0 [shape = 'u32[]', space=smem, size = 0x4, offset = 0x4, fixed_abs, tag = 'smem constant byte address 0x4 - core index']
  #allocation1 [shape = 'u32[144,128]{1,0:T(1,128)}', space=vmem, size = 0x12000, scoped, tag = 'internal scratch']
  #allocation2 [shape = 's32[1]{0}', space=sflag, size = 0x4, scoped, tag = 'scoped memory for tpu_custom_call.1']
  #allocation3 [shape = 'u8[512]{0}', space=smem, size = 0x200, scoped, tag = 'prefetched SMEM operand 0']
  %s0 = inlined_call_operand.vmem [shape: s32[4], index: 0, kind: input, shape index: {}]
  %s1 = inlined_call_operand.vmem [shape: f32[4,8,4], index: 1, kind: input, shape index: {}]
  %s2 = inlined_call_operand.vmem [shape: f32[8,128], index: 2, kind: input, shape index: {}]
  %s3 = inlined_call_operand.vmem [shape: f32[3,4,128], index: 3, kind: input, shape index: {}]
  %s4 = inlined_call_operand.vmem [shape: f32[4,8,3], index: 4, kind: output, shape index: {}]
  %s5 = sld [smem:[#allocation0]]
  $region45: #{tpu_custom_call.1} parent=0
    _
  %s7 = ssub.s32 1, %s5
  %s8 = scalar_select 0, %s7, %s5
  %s9 = sshll.u32 %s0, 4
  %s10 = int_to_ptr.vmem [resolvable:$true] %s9
  %12 = dma.vmem_to_smem %s10, 16, [#allocation3], [#allocation2]
  %13 = dma.done [#allocation2], 16
  %14 = sfence
  loop: start=0, step=1, limit=6
  $region2: #{tpu_custom_call.1} parent=0 // loop_pre_header
    _
  $region3: #{tpu_custom_call.1} parent=0 // loop_header
    %s16 = sphi 0, %s20
    %p17 = scmp.ge.s32.totalorder %s16, 6
    %s26 = sphi 0, %s28
    %s29 = sphi 0, %s26
    %s30 = sphi 0, %s29
    %s46 = sphi 0, %s30
    %s50 = sphi 0, %s50
    %s52 = sphi 0, %s50
    %s53 = sphi 0, %s52
    %s67 = sphi 0, %s53
    %s75 = sphi 0, %s77
    %s78 = sphi 0, %s75
    %s79 = sphi 0, %s78
    %s95 = sphi 0, %s79
    %s101 = sphi 0, %s103
    %s104 = sphi 0, %s101
    %s105 = sphi 0, %s104
    %s121 = sphi 0, %s105
  $region4: #{tpu_custom_call.1} parent=0 // loop_header_branch
    %19 = sbr.rel (%p17) target = $region8
  $region5: #{tpu_custom_call.1} parent=0 // loop_body
    %s21 = ssub.s32 %s16, 1
    %s22 = ssub.s32 %s16, 2
    %s23 = sadd.s32 %s16, 1
    %s24 = ssub.s32 %s16, %s23
    %p25 = scmp.eq.s32.totalorder %s24, 0
    %s27 = sadd.s32 %s26, 1
    %s28 = scalar_select %p25, %s26, %s27
    %p31 = pneg %p25
    %p32 = scmp.eq.s32.totalorder %s16, 3
    %p33 = por %p31, %p32
    %p34 = scmp.ne.s32.totalorder %s26, %s29
    %p35 = scmp.eq.s32.totalorder %s16, 0
    %p36 = por %p34, %p35
    %p37 = scmp.ne.s32.totalorder %s26, %s29
    %p38 = scmp.eq.s32.totalorder %s21, 3
    %p39 = por %p37, %p38
    %p40 = scmp.ne.s32.totalorder %s29, %s30
    %p41 = scmp.eq.s32.totalorder %s21, 0
    %p42 = por %p40, %p41
    %p43 = scmp.ne.s32.totalorder %s29, %s30
    %p44 = scmp.eq.s32.totalorder %s22, 3
    %p45 = por %p43, %p44
    %p47 = scmp.ne.s32.totalorder %s30, %s46
    %p48 = scmp.eq.s32.totalorder %s22, 0
    %p49 = por %p47, %p48
    %s51 = sadd.s32 %s50, 1
    %p54 = scmp.eq.s32.totalorder %s16, 3
    %p55 = scmp.ne.s32.totalorder %s50, %s52
    %p56 = scmp.eq.s32.totalorder %s16, 0
    %p57 = por %p55, %p56
    %p58 = scmp.ne.s32.totalorder %s50, %s52
    %p59 = scmp.eq.s32.totalorder %s21, 3
    %p60 = por %p58, %p59
    %p61 = scmp.ne.s32.totalorder %s52, %s53
    %p62 = scmp.eq.s32.totalorder %s21, 0
    %p63 = por %p61, %p62
    %p64 = scmp.ne.s32.totalorder %s52, %s53
    %p65 = scmp.eq.s32.totalorder %s22, 3
    %p66 = por %p64, %p65
    %p68 = scmp.ne.s32.totalorder %s53, %s67
    %p69 = scmp.eq.s32.totalorder %s22, 0
    %p70 = por %p68, %p69
    %s71 = sld [smem:[#allocation3 + %s16]]
    %s72 = sld [smem:[#allocation3 + %s23]]
    %s73 = ssub.s32 %s71, %s72
    %p74 = scmp.eq.s32.totalorder %s73, 0
    %s76 = sadd.s32 %s75, 1
    %s77 = scalar_select %p74, %s75, %s76
    %p80 = pneg %p74
    %p81 = scmp.eq.s32.totalorder %s16, 3
    %p82 = por %p80, %p81
    %p83 = scmp.ne.s32.totalorder %s75, %s78
    %p84 = scmp.eq.s32.totalorder %s16, 0
    %p85 = por %p83, %p84
    %p86 = scmp.ne.s32.totalorder %s75, %s78
    %p87 = scmp.eq.s32.totalorder %s21, 3
    %p88 = por %p86, %p87
    %p89 = scmp.ne.s32.totalorder %s78, %s79
    %p90 = scmp.eq.s32.totalorder %s21, 0
    %p91 = por %p89, %p90
    %p92 = scmp.ne.s32.totalorder %s78, %s79
    %p93 = scmp.eq.s32.totalorder %s22, 3
    %p94 = por %p92, %p93
    %p96 = scmp.ne.s32.totalorder %s79, %s95
    %p97 = scmp.eq.s32.totalorder %s22, 0
    %p98 = por %p96, %p97
    %s99 = ssub.s32 %s16, %s23
    %p100 = scmp.eq.s32.totalorder %s99, 0
    %s102 = sadd.s32 %s101, 1
    %s103 = scalar_select %p100, %s101, %s102
    %p106 = pneg %p100
    %p107 = scmp.eq.s32.totalorder %s16, 3
    %p108 = por %p106, %p107
    %p109 = scmp.ne.s32.totalorder %s101, %s104
    %p110 = scmp.eq.s32.totalorder %s16, 0
    %p111 = por %p109, %p110
    %p112 = scmp.ne.s32.totalorder %s101, %s104
    %p113 = scmp.eq.s32.totalorder %s21, 3
    %p114 = por %p112, %p113
    %p115 = scmp.ne.s32.totalorder %s104, %s105
    %p116 = scmp.eq.s32.totalorder %s21, 0
    %p117 = por %p115, %p116
    %p118 = scmp.ne.s32.totalorder %s104, %s105
    %p119 = scmp.eq.s32.totalorder %s22, 3
    %p120 = por %p118, %p119
    %p122 = scmp.ne.s32.totalorder %s105, %s121
    %p123 = scmp.eq.s32.totalorder %s22, 0
    %p124 = por %p122, %p123
    %p125 = scmp.le.s32.totalorder 1, %s16
    %p126 = scmp.lt.s32.totalorder %s16, 5
    %p127 = pnand %p125, %p126
    %p128 = pneg %p127
    // Predicated region
    $region9: #{tpu_custom_call.1} parent=5 // pred_check
      _
    $region10: #{tpu_custom_call.1} parent=5 // pred_check_branch
      %130 = sbr.rel (%p127) target = $region12
    $region11: #{tpu_custom_call.1} parent=5 // pred_region
      %s131 = ssub.s32 %s16, 1
      // Predicated region
      $region13: #{tpu_custom_call.1} parent=11 // pred_check
        %p132 = pneg %p63
      $region14: #{tpu_custom_call.1} parent=11 // pred_check_branch
        %134 = sbr.rel (%p132) target = $region16
      $region15: #{tpu_custom_call.1} parent=11 // pred_region
        _
      $region16: #{tpu_custom_call.1} parent=11 // pred_fallthru
        _
    $region12: #{tpu_custom_call.1} parent=5 // pred_fallthru
      _
    %p135 = scmp.lt.s32.totalorder %s16, 4
    // Predicated region
    $region17: #{tpu_custom_call.1} parent=5 // pred_check
      %p136 = pneg %p135
    $region18: #{tpu_custom_call.1} parent=5 // pred_check_branch
      %138 = sbr.rel (%p136) target = $region20
    $region19: #{tpu_custom_call.1} parent=5 // pred_region
      // Predicated region
      $region21: #{tpu_custom_call.1} parent=19 // pred_check
        %p139 = pneg %p36
      $region22: #{tpu_custom_call.1} parent=19 // pred_check_branch
        %141 = sbr.rel (%p139) target = $region24
      $region23: #{tpu_custom_call.1} parent=19 // pred_region
        %p142 = scmp.lt.s32.totalorder %s16, 3
        %s143 = scalar_select %p142, %s16, 3
        %s144 = smul.addr %s143, 8
        %s145 = scalar_lea.vmem %s1, %s144
      $region24: #{tpu_custom_call.1} parent=19 // pred_fallthru
        _
      // Predicated region
      $region25: #{tpu_custom_call.1} parent=19 // pred_check
        %p146 = pneg %p85
      $region26: #{tpu_custom_call.1} parent=19 // pred_check_branch
        %148 = sbr.rel (%p146) target = $region28
      $region27: #{tpu_custom_call.1} parent=19 // pred_region
        %s149 = sld [smem:[#allocation3 + %s16]]
        %p150 = scmp.lt.s32.totalorder %s149, 2
        %s151 = scalar_select %p150, %s149, 2
        %s152 = smul.addr %s151, 4
        %s153 = scalar_lea.vmem %s3, %s152
        %s154 = sld [smem:[#allocation3 + %s16]]
      $region28: #{tpu_custom_call.1} parent=19 // pred_fallthru
        _
    $region20: #{tpu_custom_call.1} parent=5 // pred_fallthru
      _
    %p155 = scmp.le.s32.totalorder 1, %s16
    %p156 = scmp.lt.s32.totalorder %s16, 5
    %p157 = pnand %p155, %p156
    %p158 = pneg %p157
    // Predicated region
    $region29: #{tpu_custom_call.1} parent=5 // pred_check
      _
    $region30: #{tpu_custom_call.1} parent=5 // pred_check_branch
      %160 = sbr.rel (%p157) target = $region32
    $region31: #{tpu_custom_call.1} parent=5 // pred_region
      %s161 = ssub.s32 %s16, 1
      %p162 = scmp.lt.s32.totalorder %s21, 3
      %s163 = scalar_select %p162, %s21, 3
      %s164 = smul.addr %s163, 8
      %s165 = scalar_lea.vmem %s1, %s164
      %p166 = pneg %p42
      %p167 = pneg %p39
      %p168 = pneg %p63
      %p169 = pneg %p60
      %s170 = sld [smem:[#allocation3 + %s21]]
      %p171 = scmp.lt.s32.totalorder %s170, 2
      %s172 = scalar_select %p171, %s170, 2
      %s173 = smul.addr %s172, 4
      %s174 = scalar_lea.vmem %s3, %s173
      %p175 = pneg %p91
      %p176 = pneg %p88
      %p177 = pneg %p117
      %p178 = pneg %p114
      %p179 = scmp.lt.s32.totalorder %s21, 3
      %s180 = scalar_select %p179, %s21, 3
      %s181 = smul.addr %s180, 8
      %s182 = scalar_lea.vmem %s4, %s181
      %p183 = scmp.lt.s32.totalorder %s21, 3
      %s184 = scalar_select %p183, %s21, 3
      %s185 = smul.addr %s184, 8
      %s186 = scalar_lea.vmem %s1, %s185
      %s187 = sld [smem:[#allocation3 + %s21]]
      %p188 = scmp.lt.s32.totalorder %s187, 2
      %s189 = scalar_select %p188, %s187, 2
      %s190 = smul.addr %s189, 4
      %s191 = scalar_lea.vmem %s3, %s190
      %s192 = sld [smem:[#allocation3 + %s21]]
      %p193 = scmp.lt.s32.totalorder %s21, 3
      %s194 = scalar_select %p193, %s21, 3
      %s195 = smul.addr %s194, 8
      %s196 = scalar_lea.vmem %s4, %s195
      %v197 = vld [vmem:[%s186] sm:$0xff]
      %v198 = vld [vmem:[%s2] sm:$0xff]
      %v199 = vld [vmem:[%s191] sm:$0xf]
      %v200 = vlaneseq
      %v201 = vshrl.u32 %v200, 7
      %v202 = vsub.s32 4, %v201
      %v203 = vrot.slane %v198, %v202
      %205 = vset.pattern.permute.xlu0 0
      %206 = vperm.xlu0 %205, %v197
      %v207 = vpop.permute.xlu0 %206
      %v209 = vlaneseq
      %v210 = vshrl.u32 %v209, 7
      %v211 = vsub.s32 0, %v210
      %v212 = vrot.slane %v198, %v211
      %v213 = vmul.f32 %v207, %v212
      %v214 = vadd.f32 %v203, %v213
      %215 = vset.pattern.permute.xlu0 1
      %216 = vperm.xlu0 %215, %v197
      %v217 = vpop.permute.xlu0 %216
      %v219 = vlaneseq
      %v220 = vshrl.u32 %v219, 7
      %v221 = vsub.s32 1, %v220
      %v222 = vrot.slane %v198, %v221
      %v223 = vmul.f32 %v217, %v222
      %v224 = vadd.f32 %v214, %v223
      %225 = vset.pattern.permute.xlu0 2
      %226 = vperm.xlu0 %225, %v197
      %v227 = vpop.permute.xlu0 %226
      %v229 = vlaneseq
      %v230 = vshrl.u32 %v229, 7
      %v231 = vsub.s32 2, %v230
      %v232 = vrot.slane %v198, %v231
      %v233 = vmul.f32 %v227, %v232
      %v234 = vadd.f32 %v224, %v233
      %235 = vset.pattern.permute.xlu0 3
      %236 = vperm.xlu0 %235, %v197
      %v237 = vpop.permute.xlu0 %236
      %v239 = vlaneseq
      %v240 = vshrl.u32 %v239, 7
      %v241 = vsub.s32 3, %v240
      %v242 = vrot.slane %v198, %v241
      %v243 = vmul.f32 %v237, %v242
      %v244 = vadd.f32 %v234, %v243
      %v245 = vmax.f32 %v244, 0.0
      %v246 = vlaneseq
      %v247 = vshrl.u32 %v246, 7
      %v248 = vsub.s32 0, %v247
      %v249 = vrot.slane %v199, %v248
      %v250 = vmul.f32 %v245, %v249
      %251 = vadd.xlane.f32.xlu0 %v250
      %v252 = vpop.xlane.xlu0 %251
      %v253 = vlaneseq
      %v254 = vshrl.u32 %v253, 7
      %v255 = vsub.s32 1, %v254
      %v256 = vrot.slane %v199, %v255
      %v257 = vmul.f32 %v245, %v256
      %258 = vadd.xlane.f32.xlu0 %v257
      %v259 = vpop.xlane.xlu0 %258
      %v260 = vlaneseq
      %v261 = vshrl.u32 %v260, 7
      %v262 = vsub.s32 2, %v261
      %v263 = vrot.slane %v199, %v262
      %v264 = vmul.f32 %v245, %v263
      %265 = vadd.xlane.f32.xlu0 %v264
      %v266 = vpop.xlane.xlu0 %265
      %v267 = vlaneseq
      %v268 = vand.u32 %v267, 127
      %vm269 = vcmp.eq.s32.totalorder %v268, 0
      %vm270 = vcmp.eq.s32.totalorder %v268, 1
      %v271 = vsel %vm270, %v259, %v266
      %v272 = vsel %vm269, %v252, %v271
      %v273 = vlaneseq
      %v274 = vshrl.u32 %v273, 7
      %v275 = vsub.s32 3, %v274
      %v276 = vrot.slane %v199, %v275
      %v277 = vadd.f32 %v272, %v276
      %v278 = vmax.f32 %v277, 0.0
      %v279 = vand.u32 2147483647, %v277
      %v280 = vsub.f32 0.0, %v279
      %v281 = vmul.f32 %v280, 1.442695
      %v282 = vpow.pop %v281
      %v283 = vadd.f32 %v282, 1.0
      %v284 = vlog2.pop %v283
      %v285 = vmul.f32 %v284, 0.6931472
      %v286 = vmul.f32 -0.5, %v282
      %v287 = vadd.f32 %v286, 1.0
      %v288 = vmul.f32 %v287, %v282
      %v289 = vand.u32 2147483647, %v282
      %vm290 = vcmp.lt.f32.partialorder %v289, 0.0004427343
      %v291 = vsel %vm290, %v288, %v285
      %v292 = vadd.f32 %v278, %v291
      %v293 = vsel %vm270, %v292, %v277
      %vm294 = vcmask 23552
      %295 = vst.msk [vmem:[%s196] sm:$0xff] %vm294, %v293
      %p296 = scmp.lt.s32.totalorder %s21, 3
      %s297 = scalar_select %p296, %s21, 3
      %s298 = smul.addr %s297, 8
      %s299 = scalar_lea.vmem %s4, %s298
      // Predicated region
      $region33: #{tpu_custom_call.1} parent=31 // pred_check
        %p300 = pneg %p114
      $region34: #{tpu_custom_call.1} parent=31 // pred_check_branch
        %302 = sbr.rel (%p300) target = $region36
      $region35: #{tpu_custom_call.1} parent=31 // pred_region
        _
      $region36: #{tpu_custom_call.1} parent=31 // pred_fallthru
        _
    $region32: #{tpu_custom_call.1} parent=5 // pred_fallthru
      _
    %p303 = scmp.le.s32.totalorder 2, %s16
    // Predicated region
    $region37: #{tpu_custom_call.1} parent=5 // pred_check
      %p304 = pneg %p303
    $region38: #{tpu_custom_call.1} parent=5 // pred_check_branch
      %306 = sbr.rel (%p304) target = $region40
    $region39: #{tpu_custom_call.1} parent=5 // pred_region
      %s307 = ssub.s32 %s16, 2
      // Predicated region
      $region41: #{tpu_custom_call.1} parent=39 // pred_check
        %p308 = pneg %p120
      $region42: #{tpu_custom_call.1} parent=39 // pred_check_branch
        %310 = sbr.rel (%p308) target = $region44
      $region43: #{tpu_custom_call.1} parent=39 // pred_region
        %p311 = scmp.lt.s32.totalorder %s22, 3
        %s312 = scalar_select %p311, %s22, 3
        %s313 = smul.addr %s312, 8
        %s314 = scalar_lea.vmem %s4, %s313
      $region44: #{tpu_custom_call.1} parent=39 // pred_fallthru
        _
    $region40: #{tpu_custom_call.1} parent=5 // pred_fallthru
      _
  $region6: #{tpu_custom_call.1} parent=0 // loop_footer
    %s20 = sadd.s32 1, %s16
  $region7: #{tpu_custom_call.1} parent=0 // loop_footer_branch
    %15 = sbr.rel target = $region3
  $region8: #{tpu_custom_call.1} parent=0 // loop_exit
    _

</llo_original>
